<compile_context>
chip_gen: v7x
topology: tpu7x:2x2x1
jax: 0.10.0
libtpu: 0.0.40
codegen_flags: <defaults>
</compile_context>

<pallas_src>
import functools

import jax
import jax.numpy as jnp
from jax.experimental import pallas as pl
from jax.experimental.pallas import tpu as pltpu

BN_EPS = 1e-5
VMEM_LIMIT = 32 * 1024 * 1024  # safe on v5e/v6e (128 MiB) and v7x (64 MiB)


def _round_up(x, m):
    return (x + m - 1) // m * m


def _phys_ch(c):
    """Physical (lane-dense) channel count: pad to a multiple of 128."""
    return c if c <= 3 else _round_up(c, 128)


def _pad_rows(a, m_pad):
    if a.shape[0] == m_pad:
        return a
    return jnp.pad(a, ((0, m_pad - a.shape[0]), (0, 0)))


# ----------------------------------------------------------------------------
# Phase-1 kernels: conv (matmul) + partial BN statistics (sum, sum of squares)
# ----------------------------------------------------------------------------
def _matmul_stats_kernel(p_ref, w_ref, y_ref, s_ref):
    """grid = (cout_tiles [parallel], m_tiles [arbitrary, last]).

    y_ref gets the raw conv output tile (bf16); s_ref is a (2, tn) f32
    accumulator (rows: sum, sum-of-squares) resident across the M sweep.
    """
    y = jnp.dot(p_ref[...], w_ref[...], preferred_element_type=jnp.float32)

    @pl.when(pl.program_id(1) == 0)
    def _init():
        s_ref[...] = jnp.zeros_like(s_ref)

    upd = jnp.concatenate(
        [jnp.sum(y, axis=0, keepdims=True),
         jnp.sum(y * y, axis=0, keepdims=True)], axis=0)
    s_ref[...] += upd
    y_ref[...] = y.astype(y_ref.dtype)


def _conv3x3_stats_kernel(x_ref, w_ref, y_ref, s_ref):
    """im2col-free 3x3 stride-1 conv for one padded image plane.

    x_ref: (Hp, Wp, Cin) bf16 (batch dim squeezed), w_ref: (9, Cin, tn) bf16,
    y_ref: (Ho*Wo, tn) bf16, s_ref: (2, tn) f32 accumulator over images.
    grid = (cout_tiles [parallel], n_images [arbitrary, last]).
    """
    ho = x_ref.shape[0] - 2
    wo = x_ref.shape[1] - 2
    tn = y_ref.shape[-1]
    xf = x_ref[...].astype(jnp.float32)  # slices/reshape in f32 layout

    acc = jnp.zeros((ho * wo, tn), jnp.float32)
    for ky in range(3):
        for kx in range(3):
            xs = xf[ky:ky + ho, kx:kx + wo, :]
            xs = xs.reshape(ho * wo, xf.shape[-1]).astype(jnp.bfloat16)
            acc = acc + jnp.dot(xs, w_ref[ky * 3 + kx],
                                preferred_element_type=jnp.float32)

    @pl.when(pl.program_id(1) == 0)
    def _init():
        s_ref[...] = jnp.zeros_like(s_ref)

    upd = jnp.concatenate(
        [jnp.sum(acc, axis=0, keepdims=True),
         jnp.sum(acc * acc, axis=0, keepdims=True)], axis=0)
    s_ref[...] += upd
    y_ref[...] = acc.astype(y_ref.dtype)


# ----------------------------------------------------------------------------
# Phase-2 kernels: apply BN affine (+ residual) (+ ReLU), tiled over rows
# ----------------------------------------------------------------------------
def _bn_act_kernel(y_ref, sc_ref, sh_ref, o_ref, *, relu):
    y = y_ref[...].astype(jnp.float32) * sc_ref[...] + sh_ref[...]
    if relu:
        y = jnp.maximum(y, 0.0)
    o_ref[...] = y.astype(o_ref.dtype)


def _bn_act_res_kernel(y_ref, sc_ref, sh_ref, r_ref, o_ref, *, relu):
    y = y_ref[...].astype(jnp.float32) * sc_ref[...] + sh_ref[...]
    y = y + r_ref[...].astype(jnp.float32)
    if relu:
        y = jnp.maximum(y, 0.0)
    o_ref[...] = y.astype(o_ref.dtype)


def _head_kernel(x_ref, w_ref, b_ref, o_ref):
    """AdaptiveAvgPool2d((1,1)) + flatten + Linear (tiny, single block)."""
    pooled = jnp.mean(x_ref[...].astype(jnp.float32), axis=1)  # (N, C)
    y = jnp.dot(pooled.astype(jnp.bfloat16), w_ref[...],
                preferred_element_type=jnp.float32) + b_ref[...]
    o_ref[...] = y


# ----------------------------------------------------------------------------
# Wrappers / pallas_call plumbing
# ----------------------------------------------------------------------------
def _matmul_stats(patches, w2d):
    """patches: (M, K) bf16, w2d: (K, CoutP) bf16 -> (Y (M, CoutP) bf16, stats)."""
    m, k = patches.shape
    coutp = w2d.shape[1]
    tm = min(256, _round_up(m, 8))
    m_pad = _round_up(m, tm)
    patches = _pad_rows(patches, m_pad)
    tn = min(coutp, 512)
    grid = (coutp // tn, m_pad // tm)
    y, s = pl.pallas_call(
        _matmul_stats_kernel,
        out_shape=(jax.ShapeDtypeStruct((m_pad, coutp), jnp.bfloat16),
                   jax.ShapeDtypeStruct((2, coutp), jnp.float32)),
        grid=grid,
        in_specs=[pl.BlockSpec((tm, k), lambda j, i: (i, 0)),
                  pl.BlockSpec((k, tn), lambda j, i: (0, j))],
        out_specs=(pl.BlockSpec((tm, tn), lambda j, i: (i, j)),
                   pl.BlockSpec((2, tn), lambda j, i: (0, j))),
        compiler_params=pltpu.CompilerParams(
            dimension_semantics=("parallel", "arbitrary"),
            vmem_limit_bytes=VMEM_LIMIT),
    )(patches, w2d)
    return y[:m], s


def _conv3x3_taps_stats(x, w):
    """im2col-free 3x3 / stride-1 / pad-1 conv.  x: (N,H,W,Cin) bf16."""
    n, h, wd, cin = x.shape
    coutp = w.shape[-1]
    ho, wo = h, wd
    xp = jnp.pad(x, ((0, 0), (1, 1), (1, 1), (0, 0)))
    hp, wp = h + 2, wd + 2
    tn = min(coutp, 512)
    grid = (coutp // tn, n)
    y, s = pl.pallas_call(
        _conv3x3_stats_kernel,
        out_shape=(jax.ShapeDtypeStruct((n, ho * wo, coutp), jnp.bfloat16),
                   jax.ShapeDtypeStruct((2, coutp), jnp.float32)),
        grid=grid,
        in_specs=[pl.BlockSpec((None, hp, wp, cin), lambda j, i: (i, 0, 0, 0)),
                  pl.BlockSpec((9, cin, tn), lambda j, i: (0, 0, j))],
        out_specs=(pl.BlockSpec((None, ho * wo, tn), lambda j, i: (i, 0, j)),
                   pl.BlockSpec((2, tn), lambda j, i: (0, j))),
        compiler_params=pltpu.CompilerParams(
            dimension_semantics=("parallel", "arbitrary"),
            vmem_limit_bytes=VMEM_LIMIT),
    )(xp, w)
    # Block so that any lowering/runtime failure surfaces inside the caller's
    # try/except (which then falls back to the im2col path).
    y, s = jax.block_until_ready((y, s))
    return y.reshape(n * ho * wo, coutp), s


def _bn_act(y, scale, shift, residual, relu):
    m, coutp = y.shape
    tm = min(256, _round_up(m, 8))
    m_pad = _round_up(m, tm)
    yp = _pad_rows(y, m_pad)
    tn = min(coutp, 512)
    grid = (m_pad // tm, coutp // tn)

    in_specs = [pl.BlockSpec((tm, tn), lambda i, j: (i, j)),
                pl.BlockSpec((1, tn), lambda i, j: (0, j)),
                pl.BlockSpec((1, tn), lambda i, j: (0, j))]
    args = [yp, scale.reshape(1, coutp), shift.reshape(1, coutp)]
    if residual is not None:
        in_specs.append(pl.BlockSpec((tm, tn), lambda i, j: (i, j)))
        args.append(_pad_rows(residual, m_pad))
        kern = functools.partial(_bn_act_res_kernel, relu=relu)
    else:
        kern = functools.partial(_bn_act_kernel, relu=relu)

    out = pl.pallas_call(
        kern,
        out_shape=jax.ShapeDtypeStruct((m_pad, coutp), jnp.bfloat16),
        grid=grid,
        in_specs=in_specs,
        out_specs=pl.BlockSpec((tm, tn), lambda i, j: (i, j)),
        compiler_params=pltpu.CompilerParams(
            dimension_semantics=("parallel", "parallel"),
            vmem_limit_bytes=VMEM_LIMIT),
    )(*args)
    return out[:m]


def _im2col(x, k, stride, pad):
    """bf16 im2col, tap-major [ky,kx,cin] order (matches (k*k, Cin, Cout) w)."""
    n, h, w, c = x.shape
    if pad:
        x = jnp.pad(x, ((0, 0), (pad, pad), (pad, pad), (0, 0)))
    ho = (h + 2 * pad - k) // stride + 1
    wo = (w + 2 * pad - k) // stride + 1
    cols = []
    for ky in range(k):
        for kx in range(k):
            cols.append(
                x[:, ky: ky + stride * (ho - 1) + 1: stride,
                     kx: kx + stride * (wo - 1) + 1: stride, :])
    return jnp.concatenate(cols, axis=-1).reshape(n * ho * wo, k * k * c)


def conv_bn(x, w, gamma, beta, *, ksize, stride, pad, relu, residual=None):
    """x: NHWC bf16 (physical channels).  w: (k*k, CinP, CoutP) bf16."""
    n, h, wd, cin = x.shape
    coutp = w.shape[-1]
    ho = (h + 2 * pad - ksize) // stride + 1
    wo = (wd + 2 * pad - ksize) // stride + 1
    m = n * ho * wo

    y2 = stats = None
    # im2col-free path for the common 3x3 / stride-1 convs.
    if ksize == 3 and stride == 1 and pad == 1 and cin % 128 == 0:
        try:
            y2, stats = _conv3x3_taps_stats(x, w)
        except Exception:
            # Mosaic slice/reshape support can vary across TPU generations /
            # jax builds; the im2col matmul path below is always valid.
            y2 = stats = None
    if y2 is None:
        if ksize == 1:
            xs = x if stride == 1 else x[:, ::stride, ::stride, :]
            patches = xs.reshape(m, cin)
        else:
            patches = _im2col(x, ksize, stride, pad)
        y2, stats = _matmul_stats(patches, w.reshape(ksize * ksize * cin, coutp))

    # Finalize BN batch statistics (O(Cout) work, plain JAX).  Zero-padded
    # rows/channels contribute zeros to both sums, so dividing by the true M
    # keeps the statistics exact.
    mean = stats[0] / m
    var = jnp.maximum(stats[1] / m - mean * mean, 0.0)
    inv = jax.lax.rsqrt(var + BN_EPS)
    scale = gamma * inv
    shift = beta - mean * scale

    r2 = None if residual is None else residual.reshape(m, coutp)
    out = _bn_act(y2, scale, shift, r2, relu)
    return out.reshape(n, ho, wo, coutp)


def maxpool_3x3_s2(x):
    """MaxPool2d(3, stride=2, padding=1) as a fused jnp.maximum tree (no 9x
    tap-stack materialization); XLA fuses this into a single pass."""
    n, h, w, c = x.shape
    k, s, pad = 3, 2, 1
    ho = (h + 2 * pad - k) // s + 1
    wo = (w + 2 * pad - k) // s + 1
    xp = jnp.pad(x, ((0, 0), (pad, pad), (pad, pad), (0, 0)),
                 constant_values=-jnp.inf)
    out = None
    for ky in range(k):
        for kx in range(k):
            tap = xp[:, ky: ky + s * (ho - 1) + 1: s,
                        kx: kx + s * (wo - 1) + 1: s, :]
            out = tap if out is None else jnp.maximum(out, tap)
    return out


def head(x, fc_w, fc_b):
    """Global average pool + flatten + Linear (tiny tensors, single block)."""
    n, h, w, c = x.shape
    ncls = fc_w.shape[1]
    xf = x.reshape(n, h * w, c)
    return pl.pallas_call(
        _head_kernel,
        out_shape=jax.ShapeDtypeStruct((n, ncls), jnp.float32),
        grid=(1,),
        in_specs=[pl.BlockSpec((n, h * w, c), lambda i: (0, 0, 0)),
                  pl.BlockSpec((c, ncls), lambda i: (0, 0)),
                  pl.BlockSpec((1, ncls), lambda i: (0, 0))],
        out_specs=pl.BlockSpec((n, ncls), lambda i: (0, 0)),
    )(xf, fc_w, fc_b)


# ----------------------------------------------------------------------------
# Parameter construction (deterministic, in-script).  Logical channels are
# zero-padded to physical (multiple-of-128) widths; padded channels have zero
# weights / gamma / beta so they stay exactly zero through the whole network.
# ----------------------------------------------------------------------------
def _init_conv_bn(key, cin, cout, k):
    kw, kg, kb = jax.random.split(key, 3)
    cinp, coutp = _phys_ch(cin), _phys_ch(cout)
    fan_in = k * k * cin
    w = jax.random.normal(kw, (k * k, cin, cout), jnp.float32) * (2.0 / fan_in) ** 0.5
    wp = jnp.zeros((k * k, cinp, coutp), jnp.float32).at[:, :cin, :cout].set(w)
    gamma = jnp.zeros((coutp,), jnp.float32).at[:cout].set(
        1.0 + 0.1 * jax.random.normal(kg, (cout,), jnp.float32))
    beta = jnp.zeros((coutp,), jnp.float32).at[:cout].set(
        0.1 * jax.random.normal(kb, (cout,), jnp.float32))
    return {"w": wp.astype(jnp.bfloat16), "gamma": gamma, "beta": beta}


def _init_basic_block(key, cin, cout, stride):
    k1, k2, k3 = jax.random.split(key, 3)
    p = {"c1": _init_conv_bn(k1, cin, cout, 3),
         "c2": _init_conv_bn(k2, cout, cout, 3)}
    has_down = (stride != 1) or (cin != cout)  # standard BasicBlock shortcut rule
    if has_down:
        p["down"] = _init_conv_bn(k3, cin, cout, 1)
    return (p, has_down, stride)


def build_resnet_params(key, n_blocks, n_class):
    EXPANSION = 1  # BasicBlock
    keys = list(jax.random.split(key, 2 + 4 * max(n_blocks) * 4))
    ki = iter(keys)

    params = {"stem": _init_conv_bn(next(ki), 3, 64, 3)}

    bottle_in = 64
    layers = []
    for in_ch, nb, stride in zip((64, 128, 256, 512), n_blocks, (1, 2, 2, 2)):
        blocks = [_init_basic_block(next(ki), bottle_in, in_ch, stride)]
        bottle_in = in_ch * EXPANSION
        for _ in range(nb - 1):
            blocks.append(_init_basic_block(next(ki), in_ch * EXPANSION, in_ch, 1))
        layers.append(blocks)
    params["layers"] = layers

    kf_w, kf_b = jax.random.split(next(ki))
    fc_in = bottle_in * EXPANSION  # mirrors `self.bottle_in_channels * block.expansion`
    params["fc_w"] = (jax.random.normal(kf_w, (fc_in, n_class), jnp.float32)
                      * (1.0 / fc_in) ** 0.5).astype(jnp.bfloat16)
    params["fc_b"] = 0.1 * jax.random.normal(kf_b, (1, n_class), jnp.float32)
    return params


# ----------------------------------------------------------------------------
# Forward pass
# ----------------------------------------------------------------------------
def _basic_block_forward(x, p, stride, has_down):
    out = conv_bn(x, p["c1"]["w"], p["c1"]["gamma"], p["c1"]["beta"],
                  ksize=3, stride=stride, pad=1, relu=True)
    if has_down:
        shortcut = conv_bn(x, p["down"]["w"], p["down"]["gamma"], p["down"]["beta"],
                           ksize=1, stride=stride, pad=0, relu=False)
    else:
        shortcut = x
    out = conv_bn(out, p["c2"]["w"], p["c2"]["gamma"], p["c2"]["beta"],
                  ksize=3, stride=1, pad=1, relu=True, residual=shortcut)
    return out


def resnet_forward(params, x_nhwc):
    x = x_nhwc.astype(jnp.bfloat16)
    p = params["stem"]
    # conv1: Conv2d(3->64, k=3, s=1, p=1) + BN + ReLU + MaxPool(3, s=2, p=1)
    x = conv_bn(x, p["w"], p["gamma"], p["beta"],
                ksize=3, stride=1, pad=1, relu=True)
    x = maxpool_3x3_s2(x)
    # conv2..conv5
    for layer in params["layers"]:
        for (bp, has_down, stride) in layer:
            x = _basic_block_forward(x, bp, stride, has_down)
    # adaptive avg pool + flatten + fc
    return head(x, params["fc_w"], params["fc_b"])


# ----------------------------------------------------------------------------
if __name__ == "__main__":
    key = jax.random.PRNGKey(0)
    kp, kx = jax.random.split(key)

    n_blocks = [1, 1, 1, 1]   # small synthetic config (module is generic over this)
    n_class = 32              # small head instead of the default 1000

    params = build_resnet_params(kp, n_blocks, n_class)

    # PyTorch-style NCHW input, transposed once to NHWC for the kernels.
    x_nchw = jax.random.normal(kx, (2, 3, 16, 16), jnp.float32)
    x_nhwc = jnp.transpose(x_nchw, (0, 2, 3, 1))

    logits = resnet_forward(params, x_nhwc)
    jax.block_until_ready(logits)
    assert logits.shape == (2, n_class)
    assert bool(jnp.all(jnp.isfinite(logits)))
    print("KERNEL_OK")
</pallas_src>

<mosaic_0001>
module attributes {stable_mosaic.version = 11 : i64} {
  func.func @_matmul_stats_kernel(%arg0: i32, %arg1: i32, %arg2: memref<256x27xbf16, #tpu.memory_space<vmem>>, %arg3: memref<27x128xbf16, #tpu.memory_space<vmem>>, %arg4: memref<256x128xbf16, #tpu.memory_space<vmem>>, %arg5: memref<2x128xf32, #tpu.memory_space<vmem>>) attributes {dimension_semantics = [#tpu.dimension_semantics<parallel>, #tpu.dimension_semantics<arbitrary>], iteration_bounds = array<i64: 1, 2>, scalar_prefetch = 0 : i64, scratch_operands = 0 : i64, tpu.core_type = #tpu.core_type<tc>, window_params = [{transform_indices = @transform_0, window_bounds = array<i64: 256, 27>}, {transform_indices = @transform_1, window_bounds = array<i64: 27, 128>}, {transform_indices = @transform_2, window_bounds = array<i64: 256, 128>}, {transform_indices = @transform_3, window_bounds = array<i64: 2, 128>}]} {
    %c0 = arith.constant 0 : index
    %c0_0 = arith.constant 0 : index
    %0 = vector.load %arg2[%c0, %c0_0] : memref<256x27xbf16, #tpu.memory_space<vmem>>, vector<256x27xbf16>
    %c0_1 = arith.constant 0 : index
    %c0_2 = arith.constant 0 : index
    %1 = vector.load %arg3[%c0_1, %c0_2] : memref<27x128xbf16, #tpu.memory_space<vmem>>, vector<27x128xbf16>
    %cst = arith.constant dense<0.000000e+00> : vector<256x128xf32>
    %2 = tpu.matmul %0, %1, %cst {dimension_numbers = #tpu.dot_dimension_numbers<[1], [0], [0], [1], [0, 0, 1, 1], [], []>} : vector<256x27xbf16>, vector<27x128xbf16>, vector<256x128xf32> -> vector<256x128xf32>
    %c0_i32 = arith.constant 0 : i32
    %3 = arith.cmpi eq, %arg1, %c0_i32 : i32
    %4 = arith.extui %3 : i1 to i32
    %c0_i32_3 = arith.constant 0 : i32
    %5 = arith.cmpi ne, %4, %c0_i32_3 : i32
    scf.if %5 {
      %cst_12 = arith.constant 0.000000e+00 : f32
      %17 = vector.broadcast %cst_12 : f32 to vector<2x128xf32>
      %c0_13 = arith.constant 0 : index
      %c0_14 = arith.constant 0 : index
      %18 = vector.load %arg5[%c0_13, %c0_14] : memref<2x128xf32, #tpu.memory_space<vmem>>, vector<2x128xf32>
      tpu.vector_store %arg5[%c0_13, %c0_14], %17 {strides = array<i32>} : memref<2x128xf32, #tpu.memory_space<vmem>>, vector<2x128xf32>,
    } else {
    }
    %cst_4 = arith.constant dense<0.000000e+00> : vector<128xf32>
    %6 = vector.multi_reduction <add>, %2, %cst_4 [0] : vector<256x128xf32> to vector<128xf32>
    %7 = vector.shape_cast %6 : vector<128xf32> to vector<1x128xf32>
    %8 = arith.mulf %2, %2 : vector<256x128xf32>
    %cst_5 = arith.constant dense<0.000000e+00> : vector<128xf32>
    %9 = vector.multi_reduction <add>, %8, %cst_5 [0] : vector<256x128xf32> to vector<128xf32>
    %10 = vector.shape_cast %9 : vector<128xf32> to vector<1x128xf32>
    %11 = tpu.concatenate %7, %10 in 0 : vector<1x128xf32>, vector<1x128xf32> -> vector<2x128xf32>
    %c0_6 = arith.constant 0 : index
    %c0_7 = arith.constant 0 : index
    %12 = vector.load %arg5[%c0_6, %c0_7] : memref<2x128xf32, #tpu.memory_space<vmem>>, vector<2x128xf32>
    %13 = arith.addf %12, %11 : vector<2x128xf32>
    %c0_8 = arith.constant 0 : index
    %c0_9 = arith.constant 0 : index
    %14 = vector.load %arg5[%c0_8, %c0_9] : memref<2x128xf32, #tpu.memory_space<vmem>>, vector<2x128xf32>
    tpu.vector_store %arg5[%c0_8, %c0_9], %13 {strides = array<i32>} : memref<2x128xf32, #tpu.memory_space<vmem>>, vector<2x128xf32>,
    %15 = arith.truncf %2 : vector<256x128xf32> to vector<256x128xbf16>
    %c0_10 = arith.constant 0 : index
    %c0_11 = arith.constant 0 : index
    %16 = vector.load %arg4[%c0_10, %c0_11] : memref<256x128xbf16, #tpu.memory_space<vmem>>, vector<256x128xbf16>
    tpu.vector_store %arg4[%c0_10, %c0_11], %15 {strides = array<i32>} : memref<256x128xbf16, #tpu.memory_space<vmem>>, vector<256x128xbf16>,
    return
  }
  func.func @transform_0(%arg0: i32, %arg1: i32) -> (i32, i32) {
    %c0_i32 = arith.constant 0 : i32
    %c0_i32_0 = arith.constant 0 : i32
    return %arg1, %c0_i32 : i32, i32
  }
  func.func @transform_1(%arg0: i32, %arg1: i32) -> (i32, i32) {
    %c0_i32 = arith.constant 0 : i32
    %c0_i32_0 = arith.constant 0 : i32
    return %c0_i32, %arg0 : i32, i32
  }
  func.func @transform_2(%arg0: i32, %arg1: i32) -> (i32, i32) {
    %c0_i32 = arith.constant 0 : i32
    return %arg1, %arg0 : i32, i32
  }
  func.func @transform_3(%arg0: i32, %arg1: i32) -> (i32, i32) {
    %c0_i32 = arith.constant 0 : i32
    %c0_i32_0 = arith.constant 0 : i32
    return %c0_i32, %arg0 : i32, i32
  }
}

</mosaic_0001>

<llo_original>
// kernel: tpu_custom_call.1
$region0: #{tpu_custom_call.1}
  #allocation0 [shape = 'u32[]', space=smem, size = 0x4, offset = 0x4, fixed_abs, tag = 'smem constant byte address 0x4 - core index']
  #allocation1 [shape = 'u32[144,128]{1,0:T(1,128)}', space=vmem, size = 0x12000, scoped, tag = 'internal scratch']
  %s0 = inlined_call_operand.vmem [shape: bf16[512,27], index: 0, kind: input, shape index: {}]
  %s1 = inlined_call_operand.vmem [shape: bf16[27,128], index: 1, kind: input, shape index: {}]
  %s2 = inlined_call_operand.hbm [shape: bf16[512,128], index: 2, kind: output, shape index: {0}]
  %s3 = inlined_call_operand.hbm [shape: f32[2,128], index: 3, kind: output, shape index: {1}]
  %4 = xla_tuple %s2, %s3
  %s5 = sld [smem:[#allocation0]]
  $region53: #{tpu_custom_call.1} parent=0
    _
  %s7 = ssub.s32 1, %s5
  %s8 = scalar_select 0, %s7, %s5
  $region1: #{tpu_custom_call.1} parent=0
    #allocation2 [shape = 'u8[131072]{0}', space=vmem, size = 0x20000, scoped, tag = 'output window, operand 0']
    #allocation3 [shape = 's32[2]{0}', space=sflag, size = 0x8, scoped, tag = 'scoped memory for tpu_custom_call.1']
    #allocation4 [shape = 'u8[1024]{0}', space=vmem, size = 0x400, scoped, tag = 'output window, operand 1, single buffered']
    #allocation5 [shape = 's32[1]{0}', space=sflag, size = 0x4, scoped, tag = 'scoped memory for tpu_custom_call.1']
    %9 = vsyncpa [#allocation3], 0
    %s10 = scalar_lea.sflag [#allocation3], 1
    %11 = vsyncpa %s10, 0
    %12 = vsyncpa [#allocation5], 0
    loop: start=0, step=1, limit=4
    $region2: #{tpu_custom_call.1} parent=1 // loop_pre_header
      _
    $region3: #{tpu_custom_call.1} parent=1 // loop_header
      %s14 = sphi 0, %s18
      %p15 = scmp.ge.s32.totalorder %s14, 4
      %s21 = sphi 0, %s33
      %s22 = sphi 0, %s29
      %s23 = sphi 0, %s21
      %s24 = sphi 0, %s22
      %s25 = sphi 0, %s23
      %s26 = sphi 0, %s24
      %s36 = sphi 0, %s38
      %s39 = sphi 0, %s36
      %s40 = sphi 0, %s39
      %s56 = sphi 0, %s40
      %s62 = sphi 0, %s64
      %s65 = sphi 0, %s62
      %s66 = sphi 0, %s65
      %s82 = sphi 0, %s66
      %s90 = sphi 0, %s92
      %s93 = sphi 0, %s90
      %s94 = sphi 0, %s93
      %s110 = sphi 0, %s94
      %s116 = sphi 0, %s118
      %s119 = sphi 0, %s116
      %s120 = sphi 0, %s119
      %s136 = sphi 0, %s120
    $region4: #{tpu_custom_call.1} parent=1 // loop_header_branch
      %17 = sbr.rel (%p15) target = $region8
    $region5: #{tpu_custom_call.1} parent=1 // loop_body
      %s19 = ssub.s32 %s14, 1
      %s20 = ssub.s32 %s14, 2
      %s27 = sadd.s32 1, %s22
      %p28 = scmp.ge.s32.totalorder %s27, 2
      %s29 = scalar_select %p28, 0, %s27
      %s30 = sadd.s32 1, %s21
      %s31 = scalar_select %p28, %s30, %s21
      %p32 = scmp.ge.s32.totalorder %s31, 1
      %s33 = scalar_select %p32, 0, %s31
      %s34 = ssub.s32 %s22, %s29
      %p35 = scmp.eq.s32.totalorder %s34, 0
      %s37 = sadd.s32 %s36, 1
      %s38 = scalar_select %p35, %s36, %s37
      %p41 = pneg %p35
      %p42 = scmp.eq.s32.totalorder %s14, 1
      %p43 = por %p41, %p42
      %p44 = scmp.ne.s32.totalorder %s36, %s39
      %p45 = scmp.eq.s32.totalorder %s14, 0
      %p46 = por %p44, %p45
      %p47 = scmp.ne.s32.totalorder %s36, %s39
      %p48 = scmp.eq.s32.totalorder %s19, 1
      %p49 = por %p47, %p48
      %p50 = scmp.ne.s32.totalorder %s39, %s40
      %p51 = scmp.eq.s32.totalorder %s19, 0
      %p52 = por %p50, %p51
      %p53 = scmp.ne.s32.totalorder %s39, %s40
      %p54 = scmp.eq.s32.totalorder %s20, 1
      %p55 = por %p53, %p54
      %p57 = scmp.ne.s32.totalorder %s40, %s56
      %p58 = scmp.eq.s32.totalorder %s20, 0
      %p59 = por %p57, %p58
      %s60 = ssub.s32 %s21, %s33
      %p61 = scmp.eq.s32.totalorder %s60, 0
      %s63 = sadd.s32 %s62, 1
      %s64 = scalar_select %p61, %s62, %s63
      %p67 = pneg %p61
      %p68 = scmp.eq.s32.totalorder %s14, 1
      %p69 = por %p67, %p68
      %p70 = scmp.ne.s32.totalorder %s62, %s65
      %p71 = scmp.eq.s32.totalorder %s14, 0
      %p72 = por %p70, %p71
      %p73 = scmp.ne.s32.totalorder %s62, %s65
      %p74 = scmp.eq.s32.totalorder %s19, 1
      %p75 = por %p73, %p74
      %p76 = scmp.ne.s32.totalorder %s65, %s66
      %p77 = scmp.eq.s32.totalorder %s19, 0
      %p78 = por %p76, %p77
      %p79 = scmp.ne.s32.totalorder %s65, %s66
      %p80 = scmp.eq.s32.totalorder %s20, 1
      %p81 = por %p79, %p80
      %p83 = scmp.ne.s32.totalorder %s66, %s82
      %p84 = scmp.eq.s32.totalorder %s20, 0
      %p85 = por %p83, %p84
      %s86 = ssub.s32 %s22, %s29
      %s87 = ssub.s32 %s21, %s33
      %s88 = sor.u32 %s86, %s87
      %p89 = scmp.eq.s32.totalorder %s88, 0
      %s91 = sadd.s32 %s90, 1
      %s92 = scalar_select %p89, %s90, %s91
      %p95 = pneg %p89
      %p96 = scmp.eq.s32.totalorder %s14, 1
      %p97 = por %p95, %p96
      %p98 = scmp.ne.s32.totalorder %s90, %s93
      %p99 = scmp.eq.s32.totalorder %s14, 0
      %p100 = por %p98, %p99
      %p101 = scmp.ne.s32.totalorder %s90, %s93
      %p102 = scmp.eq.s32.totalorder %s19, 1
      %p103 = por %p101, %p102
      %p104 = scmp.ne.s32.totalorder %s93, %s94
      %p105 = scmp.eq.s32.totalorder %s19, 0
      %p106 = por %p104, %p105
      %p107 = scmp.ne.s32.totalorder %s93, %s94
      %p108 = scmp.eq.s32.totalorder %s20, 1
      %p109 = por %p107, %p108
      %p111 = scmp.ne.s32.totalorder %s94, %s110
      %p112 = scmp.eq.s32.totalorder %s20, 0
      %p113 = por %p111, %p112
      %s114 = ssub.s32 %s21, %s33
      %p115 = scmp.eq.s32.totalorder %s114, 0
      %s117 = sadd.s32 %s116, 1
      %s118 = scalar_select %p115, %s116, %s117
      %p121 = pneg %p115
      %p122 = scmp.eq.s32.totalorder %s14, 1
      %p123 = por %p121, %p122
      %p124 = scmp.ne.s32.totalorder %s116, %s119
      %p125 = scmp.eq.s32.totalorder %s14, 0
      %p126 = por %p124, %p125
      %p127 = scmp.ne.s32.totalorder %s116, %s119
      %p128 = scmp.eq.s32.totalorder %s19, 1
      %p129 = por %p127, %p128
      %p130 = scmp.ne.s32.totalorder %s119, %s120
      %p131 = scmp.eq.s32.totalorder %s19, 0
      %p132 = por %p130, %p131
      %p133 = scmp.ne.s32.totalorder %s119, %s120
      %p134 = scmp.eq.s32.totalorder %s20, 1
      %p135 = por %p133, %p134
      %p137 = scmp.ne.s32.totalorder %s120, %s136
      %p138 = scmp.eq.s32.totalorder %s20, 0
      %p139 = por %p137, %p138
      %p140 = scmp.le.s32.totalorder 1, %s14
      %p141 = scmp.lt.s32.totalorder %s14, 3
      %p142 = pnand %p140, %p141
      %p143 = pneg %p142
      // Predicated region
      $region9: #{tpu_custom_call.1} parent=5 // pred_check
        _
      $region10: #{tpu_custom_call.1} parent=5 // pred_check_branch
        %145 = sbr.rel (%p142) target = $region12
      $region11: #{tpu_custom_call.1} parent=5 // pred_region
        %s146 = ssub.s32 %s14, 1
        // Predicated region
        $region13: #{tpu_custom_call.1} parent=11 // pred_check
          %p147 = pneg %p78
        $region14: #{tpu_custom_call.1} parent=11 // pred_check_branch
          %149 = sbr.rel (%p147) target = $region16
        $region15: #{tpu_custom_call.1} parent=11 // pred_region
          %p150 = scmp.lt.s32.totalorder %s23, 0
          %s151 = scalar_select %p150, %s23, 0
          %s152 = smul.addr %s151, 4
          %s153 = scalar_lea.vmem %s1, %s152
        $region16: #{tpu_custom_call.1} parent=11 // pred_fallthru
          _
      $region12: #{tpu_custom_call.1} parent=5 // pred_fallthru
        _
      %p154 = scmp.lt.s32.totalorder %s14, 2
      // Predicated region
      $region17: #{tpu_custom_call.1} parent=5 // pred_check
        %p155 = pneg %p154
      $region18: #{tpu_custom_call.1} parent=5 // pred_check_branch
        %157 = sbr.rel (%p155) target = $region20
      $region19: #{tpu_custom_call.1} parent=5 // pred_region
        // Predicated region
        $region21: #{tpu_custom_call.1} parent=19 // pred_check
          %p158 = pneg %p46
        $region22: #{tpu_custom_call.1} parent=19 // pred_check_branch
          %160 = sbr.rel (%p158) target = $region24
        $region23: #{tpu_custom_call.1} parent=19 // pred_region
          %s161 = smul.u32 32, %s22
          %p162 = scmp.lt.s32.totalorder %s161, 63
          %s163 = scalar_select %p162, %s161, 63
          %s164 = smul.addr %s163, 4
          %s165 = scalar_lea.vmem %s0, %s164
          %s166 = smul.u32 32, %s22
        $region24: #{tpu_custom_call.1} parent=19 // pred_fallthru
          _
      $region20: #{tpu_custom_call.1} parent=5 // pred_fallthru
        _
      %p167 = scmp.le.s32.totalorder 1, %s14
      %p168 = scmp.lt.s32.totalorder %s14, 3
      %p169 = pnand %p167, %p168
      %p170 = pneg %p169
      // Predicated region
      $region25: #{tpu_custom_call.1} parent=5 // pred_check
        _
      $region26: #{tpu_custom_call.1} parent=5 // pred_check_branch
        %172 = sbr.rel (%p169) target = $region28
      $region27: #{tpu_custom_call.1} parent=5 // pred_region
        %s173 = ssub.s32 %s14, 1
        %s174 = smul.u32 32, %s24
        %p175 = scmp.lt.s32.totalorder %s174, 63
        %s176 = scalar_select %p175, %s174, 63
        %s177 = smul.addr %s176, 4
        %s178 = scalar_lea.vmem %s0, %s177
        %p179 = pneg %p52
        %p180 = pneg %p49
        %p181 = scmp.lt.s32.totalorder %s23, 0
        %s182 = scalar_select %p181, %s23, 0
        %s183 = smul.addr %s182, 4
        %s184 = scalar_lea.vmem %s1, %s183
        %p185 = pneg %p78
        %p186 = pneg %p75
        %p187 = pneg %p106
        %p188 = pneg %p103
        %s189 = sand.u32 %s93, 1
        %s190 = scalar_lea.sflag [#allocation3], %s189
        %s191 = sand.u32 %s93, 1
        %s192 = smul.addr %s191, 128
        %s193 = scalar_lea.vmem [#allocation2], %s192
        %p194 = pneg %p132
        %p195 = pneg %p129
        %s196 = smul.u32 32, %s24
        %p197 = scmp.lt.s32.totalorder %s196, 63
        %s198 = scalar_select %p197, %s196, 63
        %s199 = smul.addr %s198, 4
        %s200 = scalar_lea.vmem %s0, %s199
        %s201 = smul.u32 32, %s24
        %p202 = scmp.lt.s32.totalorder %s23, 0
        %s203 = scalar_select %p202, %s23, 0
        %s204 = smul.addr %s203, 4
        %s205 = scalar_lea.vmem %s1, %s204
        %s206 = smul.u32 32, %s24
        %v208 = vld [vmem:[%s200] sm:$0xf]
        %v209 = vld [vmem:[%s200 + $0x4] sm:$0xf]
        %v210 = vld [vmem:[%s200 + $0x8] sm:$0xf]
        %v211 = vld [vmem:[%s200 + $0xc] sm:$0xf]
        %v212 = vld [vmem:[%s200 + $0x10] sm:$0xf]
        %v213 = vld [vmem:[%s200 + $0x14] sm:$0xf]
        %v214 = vld [vmem:[%s200 + $0x18] sm:$0xf]
        %v215 = vld [vmem:[%s200 + $0x1c] sm:$0xf]
        %v216 = vld [vmem:[%s200 + $0x20] sm:$0xf]
        %v217 = vld [vmem:[%s200 + $0x24] sm:$0xf]
        %v218 = vld [vmem:[%s200 + $0x28] sm:$0xf]
        %v219 = vld [vmem:[%s200 + $0x2c] sm:$0xf]
        %v220 = vld [vmem:[%s200 + $0x30] sm:$0xf]
        %v221 = vld [vmem:[%s200 + $0x34] sm:$0xf]
        %v222 = vld [vmem:[%s200 + $0x38] sm:$0xf]
        %v223 = vld [vmem:[%s200 + $0x3c] sm:$0xf]
        %v224 = vld [vmem:[%s200 + $0x40] sm:$0xf]
        %v225 = vld [vmem:[%s200 + $0x44] sm:$0xf]
        %v226 = vld [vmem:[%s200 + $0x48] sm:$0xf]
        %v227 = vld [vmem:[%s200 + $0x4c] sm:$0xf]
        %v228 = vld [vmem:[%s200 + $0x50] sm:$0xf]
        %v229 = vld [vmem:[%s200 + $0x54] sm:$0xf]
        %v230 = vld [vmem:[%s200 + $0x58] sm:$0xf]
        %v231 = vld [vmem:[%s200 + $0x5c] sm:$0xf]
        %v232 = vld [vmem:[%s200 + $0x60] sm:$0xf]
        %v233 = vld [vmem:[%s200 + $0x64] sm:$0xf]
        %v234 = vld [vmem:[%s200 + $0x68] sm:$0xf]
        %v235 = vld [vmem:[%s200 + $0x6c] sm:$0xf]
        %v236 = vld [vmem:[%s200 + $0x70] sm:$0xf]
        %v237 = vld [vmem:[%s200 + $0x74] sm:$0xf]
        %v238 = vld [vmem:[%s200 + $0x78] sm:$0xf]
        %v239 = vld [vmem:[%s200 + $0x7c] sm:$0xf]
        %v240 = vld [vmem:[%s205] sm:$0xf]
        %v241 = vld [vmem:[%s205 + $0x4] sm:$0xf]
        %v242 = vld [vmem:[%s205 + $0x8] sm:$0xf]
        %v243 = vld [vmem:[%s205 + $0xc] sm:$0x3]
        %v276 = vunpack.c.l.b16 %v208
        %v277 = vunpack.c.l.b16 %v209
        %v278 = vunpack.c.l.b16 %v210
        %v279 = vunpack.c.l.b16 %v211
        %v280 = vunpack.c.l.b16 %v212
        %v281 = vunpack.c.l.b16 %v213
        %v282 = vunpack.c.l.b16 %v214
        %v283 = vunpack.c.l.b16 %v215
        %v284 = vunpack.c.l.b16 %v216
        %v285 = vunpack.c.l.b16 %v217
        %v286 = vunpack.c.l.b16 %v218
        %v287 = vunpack.c.l.b16 %v219
        %v288 = vunpack.c.l.b16 %v220
        %v289 = vunpack.c.l.b16 %v221
        %v290 = vunpack.c.l.b16 %v222
        %v291 = vunpack.c.l.b16 %v223
        %v292 = vunpack.c.l.b16 %v224
        %v293 = vunpack.c.l.b16 %v225
        %v294 = vunpack.c.l.b16 %v226
        %v295 = vunpack.c.l.b16 %v227
        %v296 = vunpack.c.l.b16 %v228
        %v297 = vunpack.c.l.b16 %v229
        %v298 = vunpack.c.l.b16 %v230
        %v299 = vunpack.c.l.b16 %v231
        %v300 = vunpack.c.l.b16 %v232
        %v301 = vunpack.c.l.b16 %v233
        %v302 = vunpack.c.l.b16 %v234
        %v303 = vunpack.c.l.b16 %v235
        %v304 = vunpack.c.l.b16 %v236
        %v305 = vunpack.c.l.b16 %v237
        %v306 = vunpack.c.l.b16 %v238
        %v307 = vunpack.c.l.b16 %v239
        %v308 = vpack.c.b16 %v277, %v276
        %v309 = vpack.c.b16 %v279, %v278
        %v310 = vpack.c.b16 %v281, %v280
        %v311 = vpack.c.b16 %v283, %v282
        %v312 = vpack.c.b16 %v285, %v284
        %v313 = vpack.c.b16 %v287, %v286
        %v314 = vpack.c.b16 %v289, %v288
        %v315 = vpack.c.b16 %v291, %v290
        %v316 = vpack.c.b16 %v293, %v292
        %v317 = vpack.c.b16 %v295, %v294
        %v318 = vpack.c.b16 %v297, %v296
        %v319 = vpack.c.b16 %v299, %v298
        %v320 = vpack.c.b16 %v301, %v300
        %v321 = vpack.c.b16 %v303, %v302
        %v322 = vpack.c.b16 %v305, %v304
        %v323 = vpack.c.b16 %v307, %v306
        %v328 = vunpack.c.l.b16 %v240
        %v329 = vunpack.c.l.b16 %v241
        %v330 = vunpack.c.l.b16 %v242
        %v331 = vunpack.c.l.b16 %v243
        %v332 = vpack.c.b16 %v329, %v328
        %v333 = vpack.c.b16 %v331, %v330
        %vm335 = vcmask 220160
        %v337 = vsel %vm335, %v308, 0
        %v340 = vsel %vm335, %v309, 0
        %v343 = vsel %vm335, %v310, 0
        %v346 = vsel %vm335, %v311, 0
        %v349 = vsel %vm335, %v312, 0
        %v352 = vsel %vm335, %v313, 0
        %v355 = vsel %vm335, %v314, 0
        %v358 = vsel %vm335, %v315, 0
        %v361 = vsel %vm335, %v316, 0
        %v364 = vsel %vm335, %v317, 0
        %v367 = vsel %vm335, %v318, 0
        %v370 = vsel %vm335, %v319, 0
        %v373 = vsel %vm335, %v320, 0
        %v376 = vsel %vm335, %v321, 0
        %v379 = vsel %vm335, %v322, 0
        %v382 = vsel %vm335, %v323, 0
        %vm384 = vcmask 1044480
        %vm385 = vcmask 1045504
        %v386 = vsel %vm384, 4294967295, 65535
        %v387 = vsel %vm385, %v386, 0
        %v389 = vand.u32 %v333, %v387
        %391 = vmatprep.subr.bf16.mxu0 0
        %392 = vmatpush1.bf16.msra.mxu0 %v332
        %393 = vmatprep.subr.bf16.mxu0 0
        %394 = vmatpush1.bf16.msra.mxu0 %v389
        %395 = vmatprep.subr.bf16.mxu0 0
        %396 = vmatpush1.bf16.msra.mxu0 0
        %397 = vmatprep.subr.bf16.mxu0 0
        %398 = vmatpush1.bf16.msra.mxu0 0
        %399 = vmatprep.subr.bf16.mxu0 0
        %400 = vmatpush1.bf16.msra.mxu0 0
        %401 = vmatprep.subr.bf16.mxu0 0
        %402 = vmatpush1.bf16.msra.mxu0 0
        %403 = vmatprep.subr.bf16.mxu0 0
        %404 = vmatpush1.bf16.msra.mxu0 0
        %405 = vmatprep.subr.bf16.mxu0 0
        %406 = vmatpush1.bf16.msra.mxu0 0
        %407 = vmatprep.subr.bf16.mxu0 0
        %408 = vmatpush1.bf16.msra.mxu0 0
        %409 = vmatprep.subr.bf16.mxu0 0
        %410 = vmatpush1.bf16.msra.mxu0 0
        %411 = vmatprep.subr.bf16.mxu0 0
        %412 = vmatpush1.bf16.msra.mxu0 0
        %413 = vmatprep.subr.bf16.mxu0 0
        %414 = vmatpush1.bf16.msra.mxu0 0
        %415 = vmatprep.subr.bf16.mxu0 0
        %416 = vmatpush1.bf16.msra.mxu0 0
        %417 = vmatprep.subr.bf16.mxu0 0
        %418 = vmatpush1.bf16.msra.mxu0 0
        %419 = vmatprep.subr.bf16.mxu0 0
        %420 = vmatpush1.bf16.msra.mxu0 0
        %421 = vmatprep.subr.bf16.mxu0 0
        %422 = vmatpush1.bf16.msra.mxu0 0
        %423 = vmatprep.mubr.bf16.mxu0 0
        %424 = vmatmul.mubr.bf16.gmra.mrb[0].mxu0 %v337
        %v425 = vpop.f32.mrb[0].mxu0
        %v426 = vadd.f32 0.0, %v425
        %v427 = vpop.f32.mrb[0].mxu0
        %v428 = vpop.f32.mrb[0].mxu0
        %v429 = vadd.f32 0.0, %v428
        %v430 = vpop.f32.mrb[0].mxu0
        %431 = vmatprep.mubr.bf16.mxu0 0
        %432 = vmatmul.mubr.bf16.gmra.mrb[0].mxu0 %v340
        %v433 = vpop.f32.mrb[0].mxu0
        %v434 = vadd.f32 0.0, %v433
        %v435 = vpop.f32.mrb[0].mxu0
        %v436 = vpop.f32.mrb[0].mxu0
        %v437 = vadd.f32 0.0, %v436
        %v438 = vpop.f32.mrb[0].mxu0
        %439 = vmatprep.mubr.bf16.mxu0 0
        %440 = vmatmul.mubr.bf16.gmra.mrb[0].mxu0 %v343
        %v441 = vpop.f32.mrb[0].mxu0
        %v442 = vadd.f32 0.0, %v441
        %v443 = vpop.f32.mrb[0].mxu0
        %v444 = vpop.f32.mrb[0].mxu0
        %v445 = vadd.f32 0.0, %v444
        %v446 = vpop.f32.mrb[0].mxu0
        %447 = vmatprep.mubr.bf16.mxu0 0
        %448 = vmatmul.mubr.bf16.gmra.mrb[0].mxu0 %v346
        %v449 = vpop.f32.mrb[0].mxu0
        %v450 = vadd.f32 0.0, %v449
        %v451 = vpop.f32.mrb[0].mxu0
        %v452 = vpop.f32.mrb[0].mxu0
        %v453 = vadd.f32 0.0, %v452
        %v454 = vpop.f32.mrb[0].mxu0
        %455 = vmatprep.mubr.bf16.mxu0 0
        %456 = vmatmul.mubr.bf16.gmra.mrb[0].mxu0 %v349
        %v457 = vpop.f32.mrb[0].mxu0
        %v458 = vadd.f32 0.0, %v457
        %v459 = vpop.f32.mrb[0].mxu0
        %v460 = vpop.f32.mrb[0].mxu0
        %v461 = vadd.f32 0.0, %v460
        %v462 = vpop.f32.mrb[0].mxu0
        %463 = vmatprep.mubr.bf16.mxu0 0
        %464 = vmatmul.mubr.bf16.gmra.mrb[0].mxu0 %v352
        %v465 = vpop.f32.mrb[0].mxu0
        %v466 = vadd.f32 0.0, %v465
        %v467 = vpop.f32.mrb[0].mxu0
        %v468 = vpop.f32.mrb[0].mxu0
        %v469 = vadd.f32 0.0, %v468
        %v470 = vpop.f32.mrb[0].mxu0
        %471 = vmatprep.mubr.bf16.mxu0 0
        %472 = vmatmul.mubr.bf16.gmra.mrb[0].mxu0 %v355
        %v473 = vpop.f32.mrb[0].mxu0
        %v474 = vadd.f32 0.0, %v473
        %v475 = vpop.f32.mrb[0].mxu0
        %v476 = vpop.f32.mrb[0].mxu0
        %v477 = vadd.f32 0.0, %v476
        %v478 = vpop.f32.mrb[0].mxu0
        %479 = vmatprep.mubr.bf16.mxu0 0
        %480 = vmatmul.mubr.bf16.gmra.mrb[0].mxu0 %v358
        %v481 = vpop.f32.mrb[0].mxu0
        %v482 = vadd.f32 0.0, %v481
        %v483 = vpop.f32.mrb[0].mxu0
        %v484 = vpop.f32.mrb[0].mxu0
        %v485 = vadd.f32 0.0, %v484
        %v486 = vpop.f32.mrb[0].mxu0
        %487 = vmatprep.mubr.bf16.mxu0 0
        %488 = vmatmul.mubr.bf16.gmra.mrb[0].mxu0 %v361
        %v489 = vpop.f32.mrb[0].mxu0
        %v490 = vadd.f32 0.0, %v489
        %v491 = vpop.f32.mrb[0].mxu0
        %v492 = vpop.f32.mrb[0].mxu0
        %v493 = vadd.f32 0.0, %v492
        %v494 = vpop.f32.mrb[0].mxu0
        %495 = vmatprep.mubr.bf16.mxu0 0
        %496 = vmatmul.mubr.bf16.gmra.mrb[0].mxu0 %v364
        %v497 = vpop.f32.mrb[0].mxu0
        %v498 = vadd.f32 0.0, %v497
        %v499 = vpop.f32.mrb[0].mxu0
        %v500 = vpop.f32.mrb[0].mxu0
        %v501 = vadd.f32 0.0, %v500
        %v502 = vpop.f32.mrb[0].mxu0
        %503 = vmatprep.mubr.bf16.mxu0 0
        %504 = vmatmul.mubr.bf16.gmra.mrb[0].mxu0 %v367
        %v505 = vpop.f32.mrb[0].mxu0
        %v506 = vadd.f32 0.0, %v505
        %v507 = vpop.f32.mrb[0].mxu0
        %v508 = vpop.f32.mrb[0].mxu0
        %v509 = vadd.f32 0.0, %v508
        %v510 = vpop.f32.mrb[0].mxu0
        %511 = vmatprep.mubr.bf16.mxu0 0
        %512 = vmatmul.mubr.bf16.gmra.mrb[0].mxu0 %v370
        %v513 = vpop.f32.mrb[0].mxu0
        %v514 = vadd.f32 0.0, %v513
        %v515 = vpop.f32.mrb[0].mxu0
        %v516 = vpop.f32.mrb[0].mxu0
        %v517 = vadd.f32 0.0, %v516
        %v518 = vpop.f32.mrb[0].mxu0
        %519 = vmatprep.mubr.bf16.mxu0 0
        %520 = vmatmul.mubr.bf16.gmra.mrb[0].mxu0 %v373
        %v521 = vpop.f32.mrb[0].mxu0
        %v522 = vadd.f32 0.0, %v521
        %v523 = vpop.f32.mrb[0].mxu0
        %v524 = vpop.f32.mrb[0].mxu0
        %v525 = vadd.f32 0.0, %v524
        %v526 = vpop.f32.mrb[0].mxu0
        %527 = vmatprep.mubr.bf16.mxu0 0
        %528 = vmatmul.mubr.bf16.gmra.mrb[0].mxu0 %v376
        %v529 = vpop.f32.mrb[0].mxu0
        %v530 = vadd.f32 0.0, %v529
        %v531 = vpop.f32.mrb[0].mxu0
        %v532 = vpop.f32.mrb[0].mxu0
        %v533 = vadd.f32 0.0, %v532
        %v534 = vpop.f32.mrb[0].mxu0
        %535 = vmatprep.mubr.bf16.mxu0 0
        %536 = vmatmul.mubr.bf16.gmra.mrb[0].mxu0 %v379
        %v537 = vpop.f32.mrb[0].mxu0
        %v538 = vadd.f32 0.0, %v537
        %v539 = vpop.f32.mrb[0].mxu0
        %v540 = vpop.f32.mrb[0].mxu0
        %v541 = vadd.f32 0.0, %v540
        %v542 = vpop.f32.mrb[0].mxu0
        %543 = vmatprep.mubr.bf16.mxu0 0
        %544 = vmatmul.mubr.bf16.gmra.mrb[0].mxu0 %v382
        %v545 = vpop.f32.mrb[0].mxu0
        %v546 = vadd.f32 0.0, %v545
        %v547 = vpop.f32.mrb[0].mxu0
        %v548 = vpop.f32.mrb[0].mxu0
        %v549 = vadd.f32 0.0, %v548
        %v550 = vpop.f32.mrb[0].mxu0
        %551 = vdwg.mxu0
        %p552 = scmp.eq.s32.totalorder %s24, 0
        // Predicated region
        $region29: #{tpu_custom_call.1} parent=27 // pred_check
          %p553 = pneg %p552
        $region30: #{tpu_custom_call.1} parent=27 // pred_check_branch
          %555 = sbr.rel (%p553) target = $region32
        $region31: #{tpu_custom_call.1} parent=27 // pred_region
          %556 = vst [vmem:[#allocation4] sm:$0x3] 0.0
        $region32: #{tpu_custom_call.1} parent=27 // pred_fallthru
          _
        %v557 = vadd.f32 %v426, %v429
        %v558 = vadd.f32 %v557, %v434
        %v559 = vadd.f32 %v558, %v437
        %v560 = vadd.f32 %v559, %v442
        %v561 = vadd.f32 %v560, %v445
        %v562 = vadd.f32 %v561, %v450
        %v563 = vadd.f32 %v562, %v453
        %v564 = vadd.f32 %v563, %v458
        %v565 = vadd.f32 %v564, %v461
        %v566 = vadd.f32 %v565, %v466
        %v567 = vadd.f32 %v566, %v469
        %v568 = vadd.f32 %v567, %v474
        %v569 = vadd.f32 %v568, %v477
        %v570 = vadd.f32 %v569, %v482
        %v571 = vadd.f32 %v570, %v485
        %v572 = vadd.f32 %v571, %v490
        %v573 = vadd.f32 %v572, %v493
        %v574 = vadd.f32 %v573, %v498
        %v575 = vadd.f32 %v574, %v501
        %v576 = vadd.f32 %v575, %v506
        %v577 = vadd.f32 %v576, %v509
        %v578 = vadd.f32 %v577, %v514
        %v579 = vadd.f32 %v578, %v517
        %v580 = vadd.f32 %v579, %v522
        %v581 = vadd.f32 %v580, %v525
        %v582 = vadd.f32 %v581, %v530
        %v583 = vadd.f32 %v582, %v533
        %v584 = vadd.f32 %v583, %v538
        %v585 = vadd.f32 %v584, %v541
        %v586 = vadd.f32 %v585, %v546
        %v587 = vadd.f32 %v586, %v549
        %v588 = vrot.slane %v587, 4
        %v589 = vadd.f32 %v587, %v588
        %v590 = vrot.slane %v589, 2
        %v591 = vadd.f32 %v589, %v590
        %v592 = vrot.slane %v591, 1
        %v593 = vadd.f32 %v591, %v592
        %v594 = vmul.f32 %v426, %v426
        %v595 = vmul.f32 %v429, %v429
        %v596 = vmul.f32 %v434, %v434
        %v597 = vmul.f32 %v437, %v437
        %v598 = vmul.f32 %v442, %v442
        %v599 = vmul.f32 %v445, %v445
        %v600 = vmul.f32 %v450, %v450
        %v601 = vmul.f32 %v453, %v453
        %v602 = vmul.f32 %v458, %v458
        %v603 = vmul.f32 %v461, %v461
        %v604 = vmul.f32 %v466, %v466
        %v605 = vmul.f32 %v469, %v469
        %v606 = vmul.f32 %v474, %v474
        %v607 = vmul.f32 %v477, %v477
        %v608 = vmul.f32 %v482, %v482
        %v609 = vmul.f32 %v485, %v485
        %v610 = vmul.f32 %v490, %v490
        %v611 = vmul.f32 %v493, %v493
        %v612 = vmul.f32 %v498, %v498
        %v613 = vmul.f32 %v501, %v501
        %v614 = vmul.f32 %v506, %v506
        %v615 = vmul.f32 %v509, %v509
        %v616 = vmul.f32 %v514, %v514
        %v617 = vmul.f32 %v517, %v517
        %v618 = vmul.f32 %v522, %v522
        %v619 = vmul.f32 %v525, %v525
        %v620 = vmul.f32 %v530, %v530
        %v621 = vmul.f32 %v533, %v533
        %v622 = vmul.f32 %v538, %v538
        %v623 = vmul.f32 %v541, %v541
        %v624 = vmul.f32 %v546, %v546
        %v625 = vmul.f32 %v549, %v549
        %v626 = vadd.f32 %v594, %v595
        %v627 = vadd.f32 %v626, %v596
        %v628 = vadd.f32 %v627, %v597
        %v629 = vadd.f32 %v628, %v598
        %v630 = vadd.f32 %v629, %v599
        %v631 = vadd.f32 %v630, %v600
        %v632 = vadd.f32 %v631, %v601
        %v633 = vadd.f32 %v632, %v602
        %v634 = vadd.f32 %v633, %v603
        %v635 = vadd.f32 %v634, %v604
        %v636 = vadd.f32 %v635, %v605
        %v637 = vadd.f32 %v636, %v606
        %v638 = vadd.f32 %v637, %v607
        %v639 = vadd.f32 %v638, %v608
        %v640 = vadd.f32 %v639, %v609
        %v641 = vadd.f32 %v640, %v610
        %v642 = vadd.f32 %v641, %v611
        %v643 = vadd.f32 %v642, %v612
        %v644 = vadd.f32 %v643, %v613
        %v645 = vadd.f32 %v644, %v614
        %v646 = vadd.f32 %v645, %v615
        %v647 = vadd.f32 %v646, %v616
        %v648 = vadd.f32 %v647, %v617
        %v649 = vadd.f32 %v648, %v618
        %v650 = vadd.f32 %v649, %v619
        %v651 = vadd.f32 %v650, %v620
        %v652 = vadd.f32 %v651, %v621
        %v653 = vadd.f32 %v652, %v622
        %v654 = vadd.f32 %v653, %v623
        %v655 = vadd.f32 %v654, %v624
        %v656 = vadd.f32 %v655, %v625
        %v657 = vrot.slane %v656, 4
        %v658 = vadd.f32 %v656, %v657
        %v659 = vrot.slane %v658, 2
        %v660 = vadd.f32 %v658, %v659
        %v661 = vrot.slane %v660, 1
        %v662 = vadd.f32 %v660, %v661
        %vm663 = vcmask 1040384
        %v664 = vsel %vm663, %v593, %v662
        %v665 = vld [vmem:[#allocation4] sm:$0x3]
        %v666 = vadd.f32 %v665, %v664
        %667 = vst [vmem:[#allocation4] sm:$0x3] %v666
        %v668 = vpack.c.bf16 %v429, %v426
        %v669 = vpack.c.bf16 %v437, %v434
        %v670 = vpack.c.bf16 %v445, %v442
        %v671 = vpack.c.bf16 %v453, %v450
        %v672 = vpack.c.bf16 %v461, %v458
        %v673 = vpack.c.bf16 %v469, %v466
        %v674 = vpack.c.bf16 %v477, %v474
        %v675 = vpack.c.bf16 %v485, %v482
        %v676 = vpack.c.bf16 %v493, %v490
        %v677 = vpack.c.bf16 %v501, %v498
        %v678 = vpack.c.bf16 %v509, %v506
        %v679 = vpack.c.bf16 %v517, %v514
        %v680 = vpack.c.bf16 %v525, %v522
        %v681 = vpack.c.bf16 %v533, %v530
        %v682 = vpack.c.bf16 %v541, %v538
        %v683 = vpack.c.bf16 %v549, %v546
        %v700 = vunpack.c.l.b16 %v668
        %v701 = vunpack.c.h.b16 %v668
        %v702 = vunpack.c.l.b16 %v669
        %v703 = vunpack.c.h.b16 %v669
        %v704 = vunpack.c.l.b16 %v670
        %v705 = vunpack.c.h.b16 %v670
        %v706 = vunpack.c.l.b16 %v671
        %v707 = vunpack.c.h.b16 %v671
        %v708 = vunpack.c.l.b16 %v672
        %v709 = vunpack.c.h.b16 %v672
        %v710 = vunpack.c.l.b16 %v673
        %v711 = vunpack.c.h.b16 %v673
        %v712 = vunpack.c.l.b16 %v674
        %v713 = vunpack.c.h.b16 %v674
        %v714 = vunpack.c.l.b16 %v675
        %v715 = vunpack.c.h.b16 %v675
        %v716 = vunpack.c.l.b16 %v676
        %v717 = vunpack.c.h.b16 %v676
        %v718 = vunpack.c.l.b16 %v677
        %v719 = vunpack.c.h.b16 %v677
        %v720 = vunpack.c.l.b16 %v678
        %v721 = vunpack.c.h.b16 %v678
        %v722 = vunpack.c.l.b16 %v679
        %v723 = vunpack.c.h.b16 %v679
        %v724 = vunpack.c.l.b16 %v680
        %v725 = vunpack.c.h.b16 %v680
        %v726 = vunpack.c.l.b16 %v681
        %v727 = vunpack.c.h.b16 %v681
        %v728 = vunpack.c.l.b16 %v682
        %v729 = vunpack.c.h.b16 %v682
        %v730 = vunpack.c.l.b16 %v683
        %v731 = vunpack.c.h.b16 %v683
        %v732 = vpack.c.b16 %v700, %v700
        %v733 = vpack.c.b16 %v701, %v701
        %v734 = vpack.c.b16 %v702, %v702
        %v735 = vpack.c.b16 %v703, %v703
        %v736 = vpack.c.b16 %v704, %v704
        %v737 = vpack.c.b16 %v705, %v705
        %v738 = vpack.c.b16 %v706, %v706
        %v739 = vpack.c.b16 %v707, %v707
        %v740 = vpack.c.b16 %v708, %v708
        %v741 = vpack.c.b16 %v709, %v709
        %v742 = vpack.c.b16 %v710, %v710
        %v743 = vpack.c.b16 %v711, %v711
        %v744 = vpack.c.b16 %v712, %v712
        %v745 = vpack.c.b16 %v713, %v713
        %v746 = vpack.c.b16 %v714, %v714
        %v747 = vpack.c.b16 %v715, %v715
        %v748 = vpack.c.b16 %v716, %v716
        %v749 = vpack.c.b16 %v717, %v717
        %v750 = vpack.c.b16 %v718, %v718
        %v751 = vpack.c.b16 %v719, %v719
        %v752 = vpack.c.b16 %v720, %v720
        %v753 = vpack.c.b16 %v721, %v721
        %v754 = vpack.c.b16 %v722, %v722
        %v755 = vpack.c.b16 %v723, %v723
        %v756 = vpack.c.b16 %v724, %v724
        %v757 = vpack.c.b16 %v725, %v725
        %v758 = vpack.c.b16 %v726, %v726
        %v759 = vpack.c.b16 %v727, %v727
        %v760 = vpack.c.b16 %v728, %v728
        %v761 = vpack.c.b16 %v729, %v729
        %v762 = vpack.c.b16 %v730, %v730
        %v763 = vpack.c.b16 %v731, %v731
        %796 = vst [vmem:[%s193] sm:$0xf] %v732
        %797 = vst [vmem:[%s193 + $0x4] sm:$0xf] %v733
        %798 = vst [vmem:[%s193 + $0x8] sm:$0xf] %v734
        %799 = vst [vmem:[%s193 + $0xc] sm:$0xf] %v735
        %800 = vst [vmem:[%s193 + $0x10] sm:$0xf] %v736
        %801 = vst [vmem:[%s193 + $0x14] sm:$0xf] %v737
        %802 = vst [vmem:[%s193 + $0x18] sm:$0xf] %v738
        %803 = vst [vmem:[%s193 + $0x1c] sm:$0xf] %v739
        %804 = vst [vmem:[%s193 + $0x20] sm:$0xf] %v740
        %805 = vst [vmem:[%s193 + $0x24] sm:$0xf] %v741
        %806 = vst [vmem:[%s193 + $0x28] sm:$0xf] %v742
        %807 = vst [vmem:[%s193 + $0x2c] sm:$0xf] %v743
        %808 = vst [vmem:[%s193 + $0x30] sm:$0xf] %v744
        %809 = vst [vmem:[%s193 + $0x34] sm:$0xf] %v745
        %810 = vst [vmem:[%s193 + $0x38] sm:$0xf] %v746
        %811 = vst [vmem:[%s193 + $0x3c] sm:$0xf] %v747
        %812 = vst [vmem:[%s193 + $0x40] sm:$0xf] %v748
        %813 = vst [vmem:[%s193 + $0x44] sm:$0xf] %v749
        %814 = vst [vmem:[%s193 + $0x48] sm:$0xf] %v750
        %815 = vst [vmem:[%s193 + $0x4c] sm:$0xf] %v751
        %816 = vst [vmem:[%s193 + $0x50] sm:$0xf] %v752
        %817 = vst [vmem:[%s193 + $0x54] sm:$0xf] %v753
        %818 = vst [vmem:[%s193 + $0x58] sm:$0xf] %v754
        %819 = vst [vmem:[%s193 + $0x5c] sm:$0xf] %v755
        %820 = vst [vmem:[%s193 + $0x60] sm:$0xf] %v756
        %821 = vst [vmem:[%s193 + $0x64] sm:$0xf] %v757
        %822 = vst [vmem:[%s193 + $0x68] sm:$0xf] %v758
        %823 = vst [vmem:[%s193 + $0x6c] sm:$0xf] %v759
        %824 = vst [vmem:[%s193 + $0x70] sm:$0xf] %v760
        %825 = vst [vmem:[%s193 + $0x74] sm:$0xf] %v761
        %826 = vst [vmem:[%s193 + $0x78] sm:$0xf] %v762
        %827 = vst [vmem:[%s193 + $0x7c] sm:$0xf] %v763
        %s828 = sand.u32 %s93, 1
        %s829 = scalar_lea.sflag [#allocation3], %s828
        %s830 = sand.u32 %s93, 1
        %s831 = smul.addr %s830, 128
        %s832 = scalar_lea.vmem [#allocation2], %s831
        // Predicated region
        $region33: #{tpu_custom_call.1} parent=27 // pred_check
          %p833 = pneg %p103
        $region34: #{tpu_custom_call.1} parent=27 // pred_check_branch
          %835 = sbr.rel (%p833) target = $region36
        $region35: #{tpu_custom_call.1} parent=27 // pred_region
          %s836 = smul.u32 32, %s24
          %s838 = ssub.s32 2048, 2048
          %839 = vsyncadd %s829, %s838
          %s840 = sadd.s32 %s23, %s836
          %s841 = smul.addr %s840, 64
          %s842 = scalar_lea.hbm %s2, %s841
          %s843 = sshll.u32 %s832, 4
          %s844 = int_to_ptr.vmem [resolvable:$true] %s843
          %849 = dma.vmem_to_hbm [thread:$0]  %s844, 2048, %s842, %s829, 64, 64, 4
        $region36: #{tpu_custom_call.1} parent=27 // pred_fallthru
          _
        // Predicated region
        $region37: #{tpu_custom_call.1} parent=27 // pred_check
          %p850 = pneg %p129
        $region38: #{tpu_custom_call.1} parent=27 // pred_check_branch
          %852 = sbr.rel (%p850) target = $region40
        $region39: #{tpu_custom_call.1} parent=27 // pred_region
          %s854 = ssub.s32 32, 32
          %855 = vsyncadd [#allocation5], %s854
          %s856 = smul.addr %s23, 32
          %s857 = scalar_lea.hbm %s3, %s856
          %s859 = sshll.u32 [#allocation4], 4
          %s860 = int_to_ptr.vmem [resolvable:$true] %s859
          %862 = dma.vmem_to_hbm [thread:$0]  %s860, 32, %s857, [#allocation5]
        $region40: #{tpu_custom_call.1} parent=27 // pred_fallthru
          _
        // Predicated region
        $region41: #{tpu_custom_call.1} parent=27 // pred_check
          %p863 = pneg %p129
        $region42: #{tpu_custom_call.1} parent=27 // pred_check_branch
          %865 = sbr.rel (%p863) target = $region44
        $region43: #{tpu_custom_call.1} parent=27 // pred_region
          %866 = dma.done [#allocation5], 32
        $region44: #{tpu_custom_call.1} parent=27 // pred_fallthru
          _
      $region28: #{tpu_custom_call.1} parent=5 // pred_fallthru
        _
      %p867 = scmp.le.s32.totalorder 2, %s14
      // Predicated region
      $region45: #{tpu_custom_call.1} parent=5 // pred_check
        %p868 = pneg %p867
      $region46: #{tpu_custom_call.1} parent=5 // pred_check_branch
        %870 = sbr.rel (%p868) target = $region48
      $region47: #{tpu_custom_call.1} parent=5 // pred_region
        %s871 = ssub.s32 %s14, 2
        // Predicated region
        $region49: #{tpu_custom_call.1} parent=47 // pred_check
          %p872 = pneg %p109
        $region50: #{tpu_custom_call.1} parent=47 // pred_check_branch
          %874 = sbr.rel (%p872) target = $region52
        $region51: #{tpu_custom_call.1} parent=47 // pred_region
          %s875 = sand.u32 %s94, 1
          %s876 = scalar_lea.sflag [#allocation3], %s875
          %s877 = sand.u32 %s94, 1
          %s878 = smul.addr %s877, 128
          %s879 = scalar_lea.vmem [#allocation2], %s878
          %880 = dma.done %s876, 2048
        $region52: #{tpu_custom_call.1} parent=47 // pred_fallthru
          _
      $region48: #{tpu_custom_call.1} parent=5 // pred_fallthru
        _
    $region6: #{tpu_custom_call.1} parent=1 // loop_footer
      %s18 = sadd.s32 1, %s14
    $region7: #{tpu_custom_call.1} parent=1 // loop_footer_branch
      %13 = sbr.rel target = $region3
    $region8: #{tpu_custom_call.1} parent=1 // loop_exit
      _
    %881 = vsyncpa [#allocation3], 1
    %s882 = scalar_lea.sflag [#allocation3], 1
    %883 = vsyncpa %s882, 1
    %884 = vsyncpa [#allocation5], 1

</llo_original>
